<compile_context>
chip_gen: v5e
topology: v5e:2x2
jax: 0.10.0
libtpu: 0.0.40
codegen_flags: <defaults>
</compile_context>

<pallas_src>
import jax
import jax.numpy as jnp
from jax import lax
from jax.experimental import pallas as pl
from jax.experimental.pallas import tpu as pltpu

# ---- problem sizes (small, consistent with the module's forward) ----
N, CIN, H, W = 2, 4, 16, 16
COUT = 8              # encoder output channels / feature dim
NUM_CLASSES = 10      # eval_ (linear head) output dim
KH = KW = 3
HW = H * W
NHW = N * HW          # 512 -> lane dimension
PAD = W + 1           # max |lane shift| of a 3x3 tap in the flat layout
XZW = NHW + 2 * PAD   # padded flat width (546)

KTAPS = KH * KW       # 9
K36 = KTAPS * CIN     # 36 real contraction rows
KPAD = 40             # K padded to a sublane multiple of 8

# packed parameter block layout: shape (NUM_CLASSES, PCOLS)
#   rows 0:COUT,        cols 0:KPAD          -> conv taps, (COUT, 40), cols 36:40 zero
#   rows 0:COUT,        col  KPAD            -> conv bias column
#   rows 0:NUM_CLASSES, cols KPAD+1:KPAD+1+COUT -> linear weight (NC, COUT) * (1/HW)
#   rows 0:NUM_CLASSES, col  KPAD+1+COUT     -> linear bias column
PCOLS = KPAD + 2 + COUT  # 50


def combined_kernel(xz_ref, mask_ref, params_ref, out_ref, rhs_ref, feat_ref):
    # ---- im2col: build the stacked (KPAD, NHW) RHS once in VMEM scratch ----
    # Row block t*CIN:(t+1)*CIN = border-masked, lane-shifted window of tap t.
    # Each unaligned lane window is realigned exactly once here and then
    # reused by the single matmul below.
    for kh in range(KH):
        for kw in range(KW):
            t = kh * KW + kw
            off = PAD + (kh - 1) * W + (kw - 1)            # static lane offset
            rhs_ref[t * CIN:(t + 1) * CIN, :] = (
                xz_ref[:, pl.ds(off, NHW)]
                * mask_ref[t * CIN:(t + 1) * CIN, :])
    # zero the 4 pad rows so the padded K=40 contraction is exact
    rhs_ref[K36:KPAD, :] = jnp.zeros((KPAD - K36, NHW), jnp.float32)

    # ---- unpack the single parameter block ----
    wtaps = params_ref[0:COUT, 0:KPAD]                              # (8, 40)
    bconv = params_ref[0:COUT, KPAD:KPAD + 1]                       # (8, 1)
    wlin_s = params_ref[0:NUM_CLASSES, KPAD + 1:KPAD + 1 + COUT]    # (10, 8), pre-scaled by 1/HW
    blin = params_ref[0:NUM_CLASSES, KPAD + 1 + COUT:KPAD + 2 + COUT]  # (10, 1)

    # ---- conv as ONE K=40 MXU matmul + bias + ReLU ----
    conv = jnp.maximum(
        jnp.dot(wtaps, rhs_ref[...], preferred_element_type=jnp.float32)
        + bconv, 0.0)                                               # (8, 512)

    # ---- global average pool: per-image lane reduction (XLU is idle) ----
    # 1/HW is folded into wlin_s in the wrapper, so plain sums suffice.
    for n in range(N):
        feat_ref[:, n:n + 1] = jnp.sum(conv[:, n * HW:(n + 1) * HW],
                                       axis=1, keepdims=True)       # (8, 1)

    # ---- linear head: (NC, COUT) @ (COUT, N) -> (NC, N), no transposes ----
    out_t = jnp.dot(wlin_s, feat_ref[...],
                    preferred_element_type=jnp.float32) + blin      # (10, 2)
    out_ref[...] = out_t.astype(out_ref.dtype)


@jax.jit
def combined_model(x, wconv_nchw, bconv, wlin, blin):
    # --- layout plumbing only (constant-folded / fused by XLA under jit) ---
    # padded flat input: (CIN, NHW) with PAD zero lanes each side
    x_flat = x.astype(jnp.float32).transpose(1, 0, 2, 3).reshape(CIN, NHW)
    xz = jnp.pad(x_flat, ((0, 0), (PAD, PAD)))                      # (CIN, 546)

    # constant border mask laid out to match the kernel's RHS scratch rows
    col = jnp.arange(NHW)
    wi = col % W
    hi = (col // W) % H
    rows = []
    for kh in range(KH):
        dh = kh - 1
        for kw in range(KW):
            dw = kw - 1
            ok = ((hi + dh >= 0) & (hi + dh < H) &
                  (wi + dw >= 0) & (wi + dw < W))
            rows.append(jnp.broadcast_to(ok.astype(jnp.float32)[None, :],
                                         (CIN, NHW)))
    mask40 = jnp.concatenate(
        rows + [jnp.zeros((KPAD - K36, NHW), jnp.float32)], axis=0)  # (40, 512)

    # packed parameter block
    wtaps36 = wconv_nchw.astype(jnp.float32).transpose(0, 2, 3, 1).reshape(COUT, K36)
    params = jnp.zeros((NUM_CLASSES, PCOLS), jnp.float32)
    params = params.at[0:COUT, 0:K36].set(wtaps36)
    params = params.at[0:COUT, KPAD].set(bconv.astype(jnp.float32))
    params = params.at[:, KPAD + 1:KPAD + 1 + COUT].set(
        wlin.astype(jnp.float32) / HW)                               # fold 1/HW pooling scale
    params = params.at[:, KPAD + 1 + COUT].set(blin.astype(jnp.float32))

    out_t = pl.pallas_call(
        combined_kernel,
        out_shape=jax.ShapeDtypeStruct((NUM_CLASSES, N), jnp.float32),
        in_specs=[pl.BlockSpec(memory_space=pltpu.MemorySpace.VMEM)
                  for _ in range(3)],
        out_specs=pl.BlockSpec(memory_space=pltpu.MemorySpace.VMEM),
        scratch_shapes=[pltpu.VMEM((KPAD, NHW), jnp.float32),   # stacked im2col RHS
                        pltpu.VMEM((COUT, N), jnp.float32)],    # pooled features
        cost_estimate=pl.CostEstimate(flops=600_000, transcendentals=0,
                                      bytes_accessed=100_000),
    )(xz, mask40, params)
    return out_t.T                                                   # (N, NUM_CLASSES)


def reference(x, wconv_nchw, bconv, wlin, blin):
    # pure-JAX reference of the same forward pass
    conv = jax.lax.conv_general_dilated(
        x.astype(jnp.float32), wconv_nchw.astype(jnp.float32),
        window_strides=(1, 1), padding="SAME",
        dimension_numbers=("NCHW", "OIHW", "NCHW"))
    conv = jax.nn.relu(conv + bconv.reshape(1, COUT, 1, 1))
    feats = conv.mean(axis=(2, 3))                                   # (N, COUT)
    return feats @ wlin.T + blin


if __name__ == "__main__":
    key = jax.random.PRNGKey(0)
    kx, kw1, kb1, kw2, kb2 = jax.random.split(key, 5)

    x = jax.random.normal(kx, (N, CIN, H, W), dtype=jnp.float32)
    # deterministic synthetic parameters (PyTorch-like shapes)
    wconv = jax.random.normal(kw1, (COUT, CIN, KH, KW), dtype=jnp.float32) * 0.1
    bconv = jax.random.normal(kb1, (COUT,), dtype=jnp.float32) * 0.1
    wlin = jax.random.normal(kw2, (NUM_CLASSES, COUT), dtype=jnp.float32) * 0.1
    blin = jax.random.normal(kb2, (NUM_CLASSES,), dtype=jnp.float32) * 0.1

    out = combined_model(x, wconv, bconv, wlin, blin)
    out = jax.block_until_ready(out)

    ref = reference(x, wconv, bconv, wlin, blin)
    assert out.shape == (N, NUM_CLASSES)
    assert jnp.allclose(out, ref, atol=2e-4, rtol=2e-4), "mismatch vs reference"

    print("KERNEL_OK")
</pallas_src>

<mosaic_0001>
module attributes {stable_mosaic.version = 11 : i64} {
  func.func @combined_kernel(%arg0: memref<4x546xf32, #tpu.memory_space<vmem>>, %arg1: memref<40x512xf32, #tpu.memory_space<vmem>>, %arg2: memref<10x50xf32, #tpu.memory_space<vmem>>, %arg3: memref<10x2xf32, #tpu.memory_space<vmem>>, %arg4: memref<40x512xf32, #tpu.memory_space<vmem>>, %arg5: memref<8x2xf32, #tpu.memory_space<vmem>>) attributes {dimension_semantics = [], scalar_prefetch = 0 : i64, scratch_operands = 2 : i64, tpu.core_type = #tpu.core_type<tc>} {
    %c0 = arith.constant 0 : index
    %c0_0 = arith.constant 0 : index
    %0 = vector.load %arg0[%c0, %c0_0] : memref<4x546xf32, #tpu.memory_space<vmem>>, vector<4x512xf32>
    %c0_1 = arith.constant 0 : index
    %c0_2 = arith.constant 0 : index
    %1 = vector.load %arg1[%c0_1, %c0_2] : memref<40x512xf32, #tpu.memory_space<vmem>>, vector<4x512xf32>
    %2 = arith.mulf %0, %1 : vector<4x512xf32>
    %c0_3 = arith.constant 0 : index
    %c0_4 = arith.constant 0 : index
    %3 = vector.load %arg4[%c0_3, %c0_4] : memref<40x512xf32, #tpu.memory_space<vmem>>, vector<4x512xf32>
    tpu.vector_store %arg4[%c0_3, %c0_4], %2 {strides = array<i32>} : memref<40x512xf32, #tpu.memory_space<vmem>>, vector<4x512xf32>,
    %c0_5 = arith.constant 0 : index
    %c1 = arith.constant 1 : index
    %4 = vector.load %arg0[%c0_5, %c1] : memref<4x546xf32, #tpu.memory_space<vmem>>, vector<4x512xf32>
    %c4 = arith.constant 4 : index
    %c0_6 = arith.constant 0 : index
    %5 = vector.load %arg1[%c4, %c0_6] : memref<40x512xf32, #tpu.memory_space<vmem>>, vector<4x512xf32>
    %6 = arith.mulf %4, %5 : vector<4x512xf32>
    %c4_7 = arith.constant 4 : index
    %c0_8 = arith.constant 0 : index
    %7 = vector.load %arg4[%c4_7, %c0_8] : memref<40x512xf32, #tpu.memory_space<vmem>>, vector<4x512xf32>
    tpu.vector_store %arg4[%c4_7, %c0_8], %6 {strides = array<i32>} : memref<40x512xf32, #tpu.memory_space<vmem>>, vector<4x512xf32>,
    %c0_9 = arith.constant 0 : index
    %c2 = arith.constant 2 : index
    %8 = vector.load %arg0[%c0_9, %c2] : memref<4x546xf32, #tpu.memory_space<vmem>>, vector<4x512xf32>
    %c8 = arith.constant 8 : index
    %c0_10 = arith.constant 0 : index
    %9 = vector.load %arg1[%c8, %c0_10] : memref<40x512xf32, #tpu.memory_space<vmem>>, vector<4x512xf32>
    %10 = arith.mulf %8, %9 : vector<4x512xf32>
    %c8_11 = arith.constant 8 : index
    %c0_12 = arith.constant 0 : index
    %11 = vector.load %arg4[%c8_11, %c0_12] : memref<40x512xf32, #tpu.memory_space<vmem>>, vector<4x512xf32>
    tpu.vector_store %arg4[%c8_11, %c0_12], %10 {strides = array<i32>} : memref<40x512xf32, #tpu.memory_space<vmem>>, vector<4x512xf32>,
    %c0_13 = arith.constant 0 : index
    %c16 = arith.constant 16 : index
    %12 = vector.load %arg0[%c0_13, %c16] : memref<4x546xf32, #tpu.memory_space<vmem>>, vector<4x512xf32>
    %c12 = arith.constant 12 : index
    %c0_14 = arith.constant 0 : index
    %13 = vector.load %arg1[%c12, %c0_14] : memref<40x512xf32, #tpu.memory_space<vmem>>, vector<4x512xf32>
    %14 = arith.mulf %12, %13 : vector<4x512xf32>
    %c12_15 = arith.constant 12 : index
    %c0_16 = arith.constant 0 : index
    %15 = vector.load %arg4[%c12_15, %c0_16] : memref<40x512xf32, #tpu.memory_space<vmem>>, vector<4x512xf32>
    tpu.vector_store %arg4[%c12_15, %c0_16], %14 {strides = array<i32>} : memref<40x512xf32, #tpu.memory_space<vmem>>, vector<4x512xf32>,
    %c0_17 = arith.constant 0 : index
    %c17 = arith.constant 17 : index
    %16 = vector.load %arg0[%c0_17, %c17] : memref<4x546xf32, #tpu.memory_space<vmem>>, vector<4x512xf32>
    %c16_18 = arith.constant 16 : index
    %c0_19 = arith.constant 0 : index
    %17 = vector.load %arg1[%c16_18, %c0_19] : memref<40x512xf32, #tpu.memory_space<vmem>>, vector<4x512xf32>
    %18 = arith.mulf %16, %17 : vector<4x512xf32>
    %c16_20 = arith.constant 16 : index
    %c0_21 = arith.constant 0 : index
    %19 = vector.load %arg4[%c16_20, %c0_21] : memref<40x512xf32, #tpu.memory_space<vmem>>, vector<4x512xf32>
    tpu.vector_store %arg4[%c16_20, %c0_21], %18 {strides = array<i32>} : memref<40x512xf32, #tpu.memory_space<vmem>>, vector<4x512xf32>,
    %c0_22 = arith.constant 0 : index
    %c18 = arith.constant 18 : index
    %20 = vector.load %arg0[%c0_22, %c18] : memref<4x546xf32, #tpu.memory_space<vmem>>, vector<4x512xf32>
    %c20 = arith.constant 20 : index
    %c0_23 = arith.constant 0 : index
    %21 = vector.load %arg1[%c20, %c0_23] : memref<40x512xf32, #tpu.memory_space<vmem>>, vector<4x512xf32>
    %22 = arith.mulf %20, %21 : vector<4x512xf32>
    %c20_24 = arith.constant 20 : index
    %c0_25 = arith.constant 0 : index
    %23 = vector.load %arg4[%c20_24, %c0_25] : memref<40x512xf32, #tpu.memory_space<vmem>>, vector<4x512xf32>
    tpu.vector_store %arg4[%c20_24, %c0_25], %22 {strides = array<i32>} : memref<40x512xf32, #tpu.memory_space<vmem>>, vector<4x512xf32>,
    %c0_26 = arith.constant 0 : index
    %c32 = arith.constant 32 : index
    %24 = vector.load %arg0[%c0_26, %c32] : memref<4x546xf32, #tpu.memory_space<vmem>>, vector<4x512xf32>
    %c24 = arith.constant 24 : index
    %c0_27 = arith.constant 0 : index
    %25 = vector.load %arg1[%c24, %c0_27] : memref<40x512xf32, #tpu.memory_space<vmem>>, vector<4x512xf32>
    %26 = arith.mulf %24, %25 : vector<4x512xf32>
    %c24_28 = arith.constant 24 : index
    %c0_29 = arith.constant 0 : index
    %27 = vector.load %arg4[%c24_28, %c0_29] : memref<40x512xf32, #tpu.memory_space<vmem>>, vector<4x512xf32>
    tpu.vector_store %arg4[%c24_28, %c0_29], %26 {strides = array<i32>} : memref<40x512xf32, #tpu.memory_space<vmem>>, vector<4x512xf32>,
    %c0_30 = arith.constant 0 : index
    %c33 = arith.constant 33 : index
    %28 = vector.load %arg0[%c0_30, %c33] : memref<4x546xf32, #tpu.memory_space<vmem>>, vector<4x512xf32>
    %c28 = arith.constant 28 : index
    %c0_31 = arith.constant 0 : index
    %29 = vector.load %arg1[%c28, %c0_31] : memref<40x512xf32, #tpu.memory_space<vmem>>, vector<4x512xf32>
    %30 = arith.mulf %28, %29 : vector<4x512xf32>
    %c28_32 = arith.constant 28 : index
    %c0_33 = arith.constant 0 : index
    %31 = vector.load %arg4[%c28_32, %c0_33] : memref<40x512xf32, #tpu.memory_space<vmem>>, vector<4x512xf32>
    tpu.vector_store %arg4[%c28_32, %c0_33], %30 {strides = array<i32>} : memref<40x512xf32, #tpu.memory_space<vmem>>, vector<4x512xf32>,
    %c0_34 = arith.constant 0 : index
    %c34 = arith.constant 34 : index
    %32 = vector.load %arg0[%c0_34, %c34] : memref<4x546xf32, #tpu.memory_space<vmem>>, vector<4x512xf32>
    %c32_35 = arith.constant 32 : index
    %c0_36 = arith.constant 0 : index
    %33 = vector.load %arg1[%c32_35, %c0_36] : memref<40x512xf32, #tpu.memory_space<vmem>>, vector<4x512xf32>
    %34 = arith.mulf %32, %33 : vector<4x512xf32>
    %c32_37 = arith.constant 32 : index
    %c0_38 = arith.constant 0 : index
    %35 = vector.load %arg4[%c32_37, %c0_38] : memref<40x512xf32, #tpu.memory_space<vmem>>, vector<4x512xf32>
    tpu.vector_store %arg4[%c32_37, %c0_38], %34 {strides = array<i32>} : memref<40x512xf32, #tpu.memory_space<vmem>>, vector<4x512xf32>,
    %cst = arith.constant 0.000000e+00 : f32
    %36 = vector.broadcast %cst : f32 to vector<4x512xf32>
    %c36 = arith.constant 36 : index
    %c0_39 = arith.constant 0 : index
    %37 = vector.load %arg4[%c36, %c0_39] : memref<40x512xf32, #tpu.memory_space<vmem>>, vector<4x512xf32>
    tpu.vector_store %arg4[%c36, %c0_39], %36 {strides = array<i32>} : memref<40x512xf32, #tpu.memory_space<vmem>>, vector<4x512xf32>,
    %c0_40 = arith.constant 0 : index
    %c0_41 = arith.constant 0 : index
    %38 = vector.load %arg2[%c0_40, %c0_41] : memref<10x50xf32, #tpu.memory_space<vmem>>, vector<8x40xf32>
    %c0_42 = arith.constant 0 : index
    %c40 = arith.constant 40 : index
    %39 = vector.load %arg2[%c0_42, %c40] : memref<10x50xf32, #tpu.memory_space<vmem>>, vector<8x1xf32>
    %c0_43 = arith.constant 0 : index
    %c41 = arith.constant 41 : index
    %40 = vector.load %arg2[%c0_43, %c41] : memref<10x50xf32, #tpu.memory_space<vmem>>, vector<10x8xf32>
    %c0_44 = arith.constant 0 : index
    %c49 = arith.constant 49 : index
    %41 = vector.load %arg2[%c0_44, %c49] : memref<10x50xf32, #tpu.memory_space<vmem>>, vector<10x1xf32>
    %c0_45 = arith.constant 0 : index
    %c0_46 = arith.constant 0 : index
    %42 = vector.load %arg4[%c0_45, %c0_46] : memref<40x512xf32, #tpu.memory_space<vmem>>, vector<40x512xf32>
    %cst_47 = arith.constant dense<0.000000e+00> : vector<8x512xf32>
    %43 = tpu.matmul %38, %42, %cst_47 {dimension_numbers = #tpu.dot_dimension_numbers<[1], [0], [0], [1], [0, 0, 1, 1], [], []>} : vector<8x40xf32>, vector<40x512xf32>, vector<8x512xf32> -> vector<8x512xf32>
    %44 = vector.broadcast %39 : vector<8x1xf32> to vector<8x512xf32>
    %45 = arith.addf %43, %44 : vector<8x512xf32>
    %cst_48 = arith.constant 0.000000e+00 : f32
    %46 = vector.broadcast %cst_48 : f32 to vector<8x512xf32>
    %47 = arith.maximumf %45, %46 : vector<8x512xf32>
    %48 = vector.extract_strided_slice %47 {offsets = [0, 0], sizes = [8, 256], strides = [1, 1]} : vector<8x512xf32> to vector<8x256xf32>
    %cst_49 = arith.constant dense<0.000000e+00> : vector<8xf32>
    %49 = vector.multi_reduction <add>, %48, %cst_49 [1] : vector<8x256xf32> to vector<8xf32>
    %50 = vector.shape_cast %49 : vector<8xf32> to vector<8x1xf32>
    %c0_50 = arith.constant 0 : index
    %c0_51 = arith.constant 0 : index
    %51 = vector.load %arg5[%c0_50, %c0_51] : memref<8x2xf32, #tpu.memory_space<vmem>>, vector<8x1xf32>
    tpu.vector_store %arg5[%c0_50, %c0_51], %50 {strides = array<i32>} : memref<8x2xf32, #tpu.memory_space<vmem>>, vector<8x1xf32>,
    %52 = vector.extract_strided_slice %47 {offsets = [0, 256], sizes = [8, 256], strides = [1, 1]} : vector<8x512xf32> to vector<8x256xf32>
    %cst_52 = arith.constant dense<0.000000e+00> : vector<8xf32>
    %53 = vector.multi_reduction <add>, %52, %cst_52 [1] : vector<8x256xf32> to vector<8xf32>
    %54 = vector.shape_cast %53 : vector<8xf32> to vector<8x1xf32>
    %c0_53 = arith.constant 0 : index
    %c1_54 = arith.constant 1 : index
    %55 = vector.load %arg5[%c0_53, %c1_54] : memref<8x2xf32, #tpu.memory_space<vmem>>, vector<8x1xf32>
    tpu.vector_store %arg5[%c0_53, %c1_54], %54 {strides = array<i32>} : memref<8x2xf32, #tpu.memory_space<vmem>>, vector<8x1xf32>,
    %c0_55 = arith.constant 0 : index
    %c0_56 = arith.constant 0 : index
    %56 = vector.load %arg5[%c0_55, %c0_56] : memref<8x2xf32, #tpu.memory_space<vmem>>, vector<8x2xf32>
    %cst_57 = arith.constant dense<0.000000e+00> : vector<10x2xf32>
    %57 = tpu.matmul %40, %56, %cst_57 {dimension_numbers = #tpu.dot_dimension_numbers<[1], [0], [0], [1], [0, 0, 1, 1], [], []>} : vector<10x8xf32>, vector<8x2xf32>, vector<10x2xf32> -> vector<10x2xf32>
    %58 = vector.broadcast %41 : vector<10x1xf32> to vector<10x2xf32>
    %59 = arith.addf %57, %58 : vector<10x2xf32>
    %c0_58 = arith.constant 0 : index
    %c0_59 = arith.constant 0 : index
    %60 = vector.load %arg3[%c0_58, %c0_59] : memref<10x2xf32, #tpu.memory_space<vmem>>, vector<10x2xf32>
    tpu.vector_store %arg3[%c0_58, %c0_59], %59 {strides = array<i32>} : memref<10x2xf32, #tpu.memory_space<vmem>>, vector<10x2xf32>,
    return
  }
}

</mosaic_0001>

<llo_original>
// kernel: combined_model.1
$region0: #{combined_model.1}
  #allocation0 [shape = 'u32[]', space=smem, size = 0x4, offset = 0x4, fixed_abs, tag = 'smem constant byte address 0x4 - core index']
  #allocation1 [shape = 'u32[72,128]{1,0:T(1,128)}', space=vmem, size = 0x9000, scoped, tag = 'internal scratch']
  #allocation2 [shape = 'f32[40,512]{1,0:T(8,128)}', space=vmem, size = 0x14000, scoped, tag = 'scratch operand']
  #allocation3 [shape = 'f32[8,2]{1,0:T(8,128)}', space=vmem, size = 0x1000, scoped, tag = 'scratch operand']
  %s0 = inlined_call_operand.vmem [shape: f32[4,546], index: 0, kind: input, shape index: {}]
  %s1 = inlined_call_operand.vmem [shape: f32[40,512], index: 1, kind: input, shape index: {}]
  %s2 = inlined_call_operand.vmem [shape: f32[10,50], index: 2, kind: input, shape index: {}]
  %s3 = inlined_call_operand.vmem [shape: f32[10,2], index: 3, kind: output, shape index: {}]
  %s4 = sld [smem:[#allocation0]]
  $region22: #{combined_model.1} parent=0
    _
  %s6 = ssub.s32 1, %s4
  %s7 = scalar_select 0, %s6, %s4
  // Predicated region
  $region2: #{combined_model.1} parent=0 // pred_check
    _
  $region3: #{combined_model.1} parent=0 // pred_check_branch
    %9 = sbr.rel (0) target = $region5
  $region4: #{combined_model.1} parent=0 // pred_region
    _
  $region5: #{combined_model.1} parent=0 // pred_fallthru
    _
  // Predicated region
  $region6: #{combined_model.1} parent=0 // pred_check
    _
  $region7: #{combined_model.1} parent=0 // pred_check_branch
    %11 = sbr.rel (0) target = $region9
  $region8: #{combined_model.1} parent=0 // pred_region
    _
  $region9: #{combined_model.1} parent=0 // pred_fallthru
    _
  // Predicated region
  $region10: #{combined_model.1} parent=0 // pred_check
    _
  $region11: #{combined_model.1} parent=0 // pred_check_branch
    %13 = sbr.rel (0) target = $region13
  $region12: #{combined_model.1} parent=0 // pred_region
    _
  $region13: #{combined_model.1} parent=0 // pred_fallthru
    _
  %v14 = vld [vmem:[%s0] sm:$0xff]
  %v15 = vld [vmem:[%s0 + $0x8] sm:$0xff]
  %v16 = vld [vmem:[%s1] sm:$0xf]
  %v17 = vld [vmem:[%s1 + $0x8] sm:$0xf]
  %v18 = vld [vmem:[%s1 + $0x10] sm:$0xf]
  %v19 = vld [vmem:[%s1 + $0x18] sm:$0xf]
  %v24 = vrot.slane %v17, 4
  %v25 = vrot.slane %v19, 4
  %vm26 = vcmask 1043456
  %v27 = vsel %vm26, %v16, %v24
  %v28 = vsel %vm26, %v18, %v25
  %v31 = vmul.f32 %v14, %v27
  %v32 = vmul.f32 %v15, %v28
  %35 = vst [vmem:[#allocation1] ss:$2 sm:$0xff] %v31
  %s36 = scalar_lea.vmem [#allocation1], 16
  %37 = vst [vmem:[%s36] ss:$2 sm:$0xff] %v32
  %v38 = vld.sshfl [vmem:[#allocation1] sm:$0xff pattern:$0x75316420]
  %v39 = vld.sshfl [vmem:[#allocation1 + $0x8] sm:$0xff pattern:$0x75316420]
  %v40 = vld.sshfl [vmem:[#allocation1 + $0x10] sm:$0xff pattern:$0x75316420]
  %v41 = vld.sshfl [vmem:[#allocation1 + $0x18] sm:$0xff pattern:$0x75316420]
  %46 = vst [vmem:[#allocation2] sm:$0xf] %v38
  %47 = vst [vmem:[#allocation2 + $0x8] sm:$0xf] %v39
  %48 = vst [vmem:[#allocation2 + $0x10] sm:$0xf] %v40
  %49 = vst [vmem:[#allocation2 + $0x18] sm:$0xf] %v41
  %v50 = vld [vmem:[%s0] sm:$0xff]
  %v51 = vld [vmem:[%s0 + $0x8] sm:$0xff]
  %v52 = vld [vmem:[%s0 + $0x10] sm:$0xf]
  %v53 = vld [vmem:[%s1] sm:$0xf0]
  %v54 = vld [vmem:[%s1 + $0x8] sm:$0xf0]
  %v55 = vld [vmem:[%s1 + $0x10] sm:$0xf0]
  %v56 = vld [vmem:[%s1 + $0x18] sm:$0xf0]
  %61 = vst.sshfl [vmem:[#allocation1] sm:$0xff pattern:$0x75316420] %v53
  %62 = vst.sshfl [vmem:[#allocation1 + $0x8] sm:$0xff pattern:$0x75316420] %v54
  %63 = vst.sshfl [vmem:[#allocation1 + $0x10] sm:$0xff pattern:$0x75316420] %v55
  %64 = vst.sshfl [vmem:[#allocation1 + $0x18] sm:$0xff pattern:$0x75316420] %v56
  %s65 = scalar_lea.vmem [#allocation1], 1
  %v66 = vld [vmem:[%s65] ss:$2 sm:$0xff]
  %s67 = scalar_lea.vmem [#allocation1], 17
  %v68 = vld [vmem:[%s67] ss:$2 sm:$0xff]
  %69 = vrot.lane.b32.xlu0 %v66, 1
  %v70 = vpop.permute.xlu0 %69
  %71 = vrot.lane.b32.xlu0 %v68, 1
  %v72 = vpop.permute.xlu0 %71
  %v73 = vrot.slane %v70, 4
  %v74 = vrot.slane %v72, 4
  %vm75 = vcmask 7168
  %v76 = vsel %vm75, %v73, %v70
  %v77 = vsel %vm26, %v73, %v74
  %v78 = vsel %vm75, %v77, %v72
  %v82 = vmul.f32 %v50, %v76
  %v83 = vmul.f32 %v51, %v78
  %v84 = vmul.f32 %v52, %v74
  %s88 = scalar_lea.vmem [#allocation1], 1
  %89 = vst [vmem:[%s88] ss:$2 sm:$0xff] %v82
  %s90 = scalar_lea.vmem [#allocation1], 17
  %91 = vst [vmem:[%s90] ss:$2 sm:$0xff] %v83
  %s92 = scalar_lea.vmem [#allocation1], 33
  %93 = vst [vmem:[%s92] ss:$2 sm:$0xff] %v84
  %v94 = vld.sshfl [vmem:[#allocation1] sm:$0xff pattern:$0x75316420]
  %v95 = vld.sshfl [vmem:[#allocation1 + $0x8] sm:$0xff pattern:$0x75316420]
  %v96 = vld.sshfl [vmem:[#allocation1 + $0x10] sm:$0xff pattern:$0x75316420]
  %v97 = vld.sshfl [vmem:[#allocation1 + $0x18] sm:$0xff pattern:$0x75316420]
  %v98 = vld.sshfl [vmem:[#allocation1 + $0x20] sm:$0xff pattern:$0x75316420]
  %99 = vrot.lane.b32.xlu0 %v94, 127
  %v100 = vpop.permute.xlu0 %99
  %101 = vrot.lane.b32.xlu0 %v95, 127
  %v102 = vpop.permute.xlu0 %101
  %103 = vrot.lane.b32.xlu0 %v96, 127
  %v104 = vpop.permute.xlu0 %103
  %105 = vrot.lane.b32.xlu0 %v97, 127
  %v106 = vpop.permute.xlu0 %105
  %107 = vrot.lane.b32.xlu0 %v98, 127
  %v108 = vpop.permute.xlu0 %107
  %vm109 = vcmask 1039360
  %v110 = vsel %vm109, %v100, %v102
  %v111 = vsel %vm109, %v102, %v104
  %v112 = vsel %vm109, %v104, %v106
  %v113 = vsel %vm109, %v106, %v108
  %118 = vst [vmem:[#allocation2] sm:$0xf0] %v110
  %119 = vst [vmem:[#allocation2 + $0x8] sm:$0xf0] %v111
  %120 = vst [vmem:[#allocation2 + $0x10] sm:$0xf0] %v112
  %121 = vst [vmem:[#allocation2 + $0x18] sm:$0xf0] %v113
  %v122 = vld [vmem:[%s0] sm:$0xff]
  %v123 = vld [vmem:[%s0 + $0x8] sm:$0xff]
  %v124 = vld [vmem:[%s0 + $0x10] sm:$0xf]
  %v125 = vld [vmem:[%s1 + $0x20] sm:$0xf]
  %v126 = vld [vmem:[%s1 + $0x28] sm:$0xf]
  %v127 = vld [vmem:[%s1 + $0x30] sm:$0xf]
  %v128 = vld [vmem:[%s1 + $0x38] sm:$0xf]
  %v133 = vrot.slane %v126, 4
  %v134 = vrot.slane %v128, 4
  %v135 = vsel %vm26, %v125, %v133
  %v136 = vsel %vm26, %v127, %v134
  %137 = vrot.lane.b32.xlu0 %v135, 2
  %v138 = vpop.permute.xlu0 %137
  %139 = vrot.lane.b32.xlu0 %v136, 2
  %v140 = vpop.permute.xlu0 %139
  %v141 = vrot.slane %v138, 4
  %v142 = vrot.slane %v140, 4
  %vm143 = vcmask 15360
  %v144 = vsel %vm143, %v141, %v138
  %v145 = vsel %vm26, %v141, %v142
  %v146 = vsel %vm143, %v145, %v140
  %v150 = vmul.f32 %v122, %v144
  %v151 = vmul.f32 %v123, %v146
  %v152 = vmul.f32 %v124, %v142
  %156 = vst [vmem:[#allocation1] ss:$2 sm:$0xff] %v150
  %s157 = scalar_lea.vmem [#allocation1], 16
  %158 = vst [vmem:[%s157] ss:$2 sm:$0xff] %v151
  %s159 = scalar_lea.vmem [#allocation1], 32
  %160 = vst [vmem:[%s159] ss:$2 sm:$0xff] %v152
  %v161 = vld.sshfl [vmem:[#allocation1] sm:$0xff pattern:$0x75316420]
  %v162 = vld.sshfl [vmem:[#allocation1 + $0x8] sm:$0xff pattern:$0x75316420]
  %v163 = vld.sshfl [vmem:[#allocation1 + $0x10] sm:$0xff pattern:$0x75316420]
  %v164 = vld.sshfl [vmem:[#allocation1 + $0x18] sm:$0xff pattern:$0x75316420]
  %v165 = vld.sshfl [vmem:[#allocation1 + $0x20] sm:$0xff pattern:$0x75316420]
  %166 = vrot.lane.b32.xlu0 %v161, 126
  %v167 = vpop.permute.xlu0 %166
  %168 = vrot.lane.b32.xlu0 %v162, 126
  %v169 = vpop.permute.xlu0 %168
  %170 = vrot.lane.b32.xlu0 %v163, 126
  %v171 = vpop.permute.xlu0 %170
  %172 = vrot.lane.b32.xlu0 %v164, 126
  %v173 = vpop.permute.xlu0 %172
  %174 = vrot.lane.b32.xlu0 %v165, 126
  %v175 = vpop.permute.xlu0 %174
  %vm176 = vcmask 1031168
  %v177 = vsel %vm176, %v167, %v169
  %v178 = vsel %vm176, %v169, %v171
  %v179 = vsel %vm176, %v171, %v173
  %v180 = vsel %vm176, %v173, %v175
  %185 = vst [vmem:[#allocation2 + $0x20] sm:$0xf] %v177
  %186 = vst [vmem:[#allocation2 + $0x28] sm:$0xf] %v178
  %187 = vst [vmem:[#allocation2 + $0x30] sm:$0xf] %v179
  %188 = vst [vmem:[#allocation2 + $0x38] sm:$0xf] %v180
  %v189 = vld [vmem:[%s0] sm:$0xff]
  %v190 = vld [vmem:[%s0 + $0x8] sm:$0xff]
  %v191 = vld [vmem:[%s0 + $0x10] sm:$0xf]
  %v192 = vld [vmem:[%s1 + $0x20] sm:$0xf0]
  %v193 = vld [vmem:[%s1 + $0x28] sm:$0xf0]
  %v194 = vld [vmem:[%s1 + $0x30] sm:$0xf0]
  %v195 = vld [vmem:[%s1 + $0x38] sm:$0xf0]
  %200 = vst.sshfl [vmem:[#allocation1] sm:$0xff pattern:$0x75316420] %v192
  %201 = vst.sshfl [vmem:[#allocation1 + $0x8] sm:$0xff pattern:$0x75316420] %v193
  %202 = vst.sshfl [vmem:[#allocation1 + $0x10] sm:$0xff pattern:$0x75316420] %v194
  %203 = vst.sshfl [vmem:[#allocation1 + $0x18] sm:$0xff pattern:$0x75316420] %v195
  %s204 = scalar_lea.vmem [#allocation1], 1
  %v205 = vld [vmem:[%s204] ss:$2 sm:$0xff]
  %s206 = scalar_lea.vmem [#allocation1], 17
  %v207 = vld [vmem:[%s206] ss:$2 sm:$0xff]
  %208 = vrot.lane.b32.xlu0 %v205, 16
  %v209 = vpop.permute.xlu0 %208
  %210 = vrot.lane.b32.xlu0 %v207, 16
  %v211 = vpop.permute.xlu0 %210
  %v212 = vrot.slane %v209, 4
  %v213 = vrot.slane %v211, 4
  %vm214 = vcmask 130048
  %v215 = vsel %vm214, %v212, %v209
  %v216 = vsel %vm26, %v212, %v213
  %v217 = vsel %vm214, %v216, %v211
  %v221 = vmul.f32 %v189, %v215
  %v222 = vmul.f32 %v190, %v217
  %v223 = vmul.f32 %v191, %v213
  %s227 = scalar_lea.vmem [#allocation1], 1
  %228 = vst [vmem:[%s227] ss:$2 sm:$0xff] %v221
  %s229 = scalar_lea.vmem [#allocation1], 17
  %230 = vst [vmem:[%s229] ss:$2 sm:$0xff] %v222
  %s231 = scalar_lea.vmem [#allocation1], 33
  %232 = vst [vmem:[%s231] ss:$2 sm:$0xff] %v223
  %v233 = vld.sshfl [vmem:[#allocation1] sm:$0xff pattern:$0x75316420]
  %v234 = vld.sshfl [vmem:[#allocation1 + $0x8] sm:$0xff pattern:$0x75316420]
  %v235 = vld.sshfl [vmem:[#allocation1 + $0x10] sm:$0xff pattern:$0x75316420]
  %v236 = vld.sshfl [vmem:[#allocation1 + $0x18] sm:$0xff pattern:$0x75316420]
  %v237 = vld.sshfl [vmem:[#allocation1 + $0x20] sm:$0xff pattern:$0x75316420]
  %238 = vrot.lane.b32.xlu0 %v233, 112
  %v239 = vpop.permute.xlu0 %238
  %240 = vrot.lane.b32.xlu0 %v234, 112
  %v241 = vpop.permute.xlu0 %240
  %242 = vrot.lane.b32.xlu0 %v235, 112
  %v243 = vpop.permute.xlu0 %242
  %244 = vrot.lane.b32.xlu0 %v236, 112
  %v245 = vpop.permute.xlu0 %244
  %246 = vrot.lane.b32.xlu0 %v237, 112
  %v247 = vpop.permute.xlu0 %246
  %vm248 = vcmask 916480
  %v249 = vsel %vm248, %v239, %v241
  %v250 = vsel %vm248, %v241, %v243
  %v251 = vsel %vm248, %v243, %v245
  %v252 = vsel %vm248, %v245, %v247
  %257 = vst [vmem:[#allocation2 + $0x20] sm:$0xf0] %v249
  %258 = vst [vmem:[#allocation2 + $0x28] sm:$0xf0] %v250
  %259 = vst [vmem:[#allocation2 + $0x30] sm:$0xf0] %v251
  %260 = vst [vmem:[#allocation2 + $0x38] sm:$0xf0] %v252
  %v261 = vld [vmem:[%s0] sm:$0xff]
  %v262 = vld [vmem:[%s0 + $0x8] sm:$0xff]
  %v263 = vld [vmem:[%s0 + $0x10] sm:$0xf]
  %v264 = vld [vmem:[%s1 + $0x40] sm:$0xf]
  %v265 = vld [vmem:[%s1 + $0x48] sm:$0xf]
  %v266 = vld [vmem:[%s1 + $0x50] sm:$0xf]
  %v267 = vld [vmem:[%s1 + $0x58] sm:$0xf]
  %v272 = vrot.slane %v265, 4
  %v273 = vrot.slane %v267, 4
  %v274 = vsel %vm26, %v264, %v272
  %v275 = vsel %vm26, %v266, %v273
  %276 = vrot.lane.b32.xlu0 %v274, 17
  %v277 = vpop.permute.xlu0 %276
  %278 = vrot.lane.b32.xlu0 %v275, 17
  %v279 = vpop.permute.xlu0 %278
  %v280 = vrot.slane %v277, 4
  %v281 = vrot.slane %v279, 4
  %vm282 = vcmask 138240
  %v283 = vsel %vm282, %v280, %v277
  %v284 = vsel %vm26, %v280, %v281
  %v285 = vsel %vm282, %v284, %v279
  %v289 = vmul.f32 %v261, %v283
  %v290 = vmul.f32 %v262, %v285
  %v291 = vmul.f32 %v263, %v281
  %295 = vst [vmem:[#allocation1] ss:$2 sm:$0xff] %v289
  %s296 = scalar_lea.vmem [#allocation1], 16
  %297 = vst [vmem:[%s296] ss:$2 sm:$0xff] %v290
  %s298 = scalar_lea.vmem [#allocation1], 32
  %299 = vst [vmem:[%s298] ss:$2 sm:$0xff] %v291
  %v300 = vld.sshfl [vmem:[#allocation1] sm:$0xff pattern:$0x75316420]
  %v301 = vld.sshfl [vmem:[#allocation1 + $0x8] sm:$0xff pattern:$0x75316420]
  %v302 = vld.sshfl [vmem:[#allocation1 + $0x10] sm:$0xff pattern:$0x75316420]
  %v303 = vld.sshfl [vmem:[#allocation1 + $0x18] sm:$0xff pattern:$0x75316420]
  %v304 = vld.sshfl [vmem:[#allocation1 + $0x20] sm:$0xff pattern:$0x75316420]
  %305 = vrot.lane.b32.xlu0 %v300, 111
  %v306 = vpop.permute.xlu0 %305
  %307 = vrot.lane.b32.xlu0 %v301, 111
  %v308 = vpop.permute.xlu0 %307
  %309 = vrot.lane.b32.xlu0 %v302, 111
  %v310 = vpop.permute.xlu0 %309
  %311 = vrot.lane.b32.xlu0 %v303, 111
  %v312 = vpop.permute.xlu0 %311
  %313 = vrot.lane.b32.xlu0 %v304, 111
  %v314 = vpop.permute.xlu0 %313
  %vm315 = vcmask 908288
  %v316 = vsel %vm315, %v306, %v308
  %v317 = vsel %vm315, %v308, %v310
  %v318 = vsel %vm315, %v310, %v312
  %v319 = vsel %vm315, %v312, %v314
  %324 = vst [vmem:[#allocation2 + $0x40] sm:$0xf] %v316
  %325 = vst [vmem:[#allocation2 + $0x48] sm:$0xf] %v317
  %326 = vst [vmem:[#allocation2 + $0x50] sm:$0xf] %v318
  %327 = vst [vmem:[#allocation2 + $0x58] sm:$0xf] %v319
  %v328 = vld [vmem:[%s0] sm:$0xff]
  %v329 = vld [vmem:[%s0 + $0x8] sm:$0xff]
  %v330 = vld [vmem:[%s0 + $0x10] sm:$0xf]
  %v331 = vld [vmem:[%s1 + $0x40] sm:$0xf0]
  %v332 = vld [vmem:[%s1 + $0x48] sm:$0xf0]
  %v333 = vld [vmem:[%s1 + $0x50] sm:$0xf0]
  %v334 = vld [vmem:[%s1 + $0x58] sm:$0xf0]
  %339 = vst.sshfl [vmem:[#allocation1] sm:$0xff pattern:$0x75316420] %v331
  %340 = vst.sshfl [vmem:[#allocation1 + $0x8] sm:$0xff pattern:$0x75316420] %v332
  %341 = vst.sshfl [vmem:[#allocation1 + $0x10] sm:$0xff pattern:$0x75316420] %v333
  %342 = vst.sshfl [vmem:[#allocation1 + $0x18] sm:$0xff pattern:$0x75316420] %v334
  %s343 = scalar_lea.vmem [#allocation1], 1
  %v344 = vld [vmem:[%s343] ss:$2 sm:$0xff]
  %s345 = scalar_lea.vmem [#allocation1], 17
  %v346 = vld [vmem:[%s345] ss:$2 sm:$0xff]
  %347 = vrot.lane.b32.xlu0 %v344, 18
  %v348 = vpop.permute.xlu0 %347
  %349 = vrot.lane.b32.xlu0 %v346, 18
  %v350 = vpop.permute.xlu0 %349
  %v351 = vrot.slane %v348, 4
  %v352 = vrot.slane %v350, 4
  %vm353 = vcmask 146432
  %v354 = vsel %vm353, %v351, %v348
  %v355 = vsel %vm26, %v351, %v352
  %v356 = vsel %vm353, %v355, %v350
  %v360 = vmul.f32 %v328, %v354
  %v361 = vmul.f32 %v329, %v356
  %v362 = vmul.f32 %v330, %v352
  %s366 = scalar_lea.vmem [#allocation1], 1
  %367 = vst [vmem:[%s366] ss:$2 sm:$0xff] %v360
  %s368 = scalar_lea.vmem [#allocation1], 17
  %369 = vst [vmem:[%s368] ss:$2 sm:$0xff] %v361
  %s370 = scalar_lea.vmem [#allocation1], 33
  %371 = vst [vmem:[%s370] ss:$2 sm:$0xff] %v362
  %v372 = vld.sshfl [vmem:[#allocation1] sm:$0xff pattern:$0x75316420]
  %v373 = vld.sshfl [vmem:[#allocation1 + $0x8] sm:$0xff pattern:$0x75316420]
  %v374 = vld.sshfl [vmem:[#allocation1 + $0x10] sm:$0xff pattern:$0x75316420]
  %v375 = vld.sshfl [vmem:[#allocation1 + $0x18] sm:$0xff pattern:$0x75316420]
  %v376 = vld.sshfl [vmem:[#allocation1 + $0x20] sm:$0xff pattern:$0x75316420]
  %377 = vrot.lane.b32.xlu0 %v372, 110
  %v378 = vpop.permute.xlu0 %377
  %379 = vrot.lane.b32.xlu0 %v373, 110
  %v380 = vpop.permute.xlu0 %379
  %381 = vrot.lane.b32.xlu0 %v374, 110
  %v382 = vpop.permute.xlu0 %381
  %383 = vrot.lane.b32.xlu0 %v375, 110
  %v384 = vpop.permute.xlu0 %383
  %385 = vrot.lane.b32.xlu0 %v376, 110
  %v386 = vpop.permute.xlu0 %385
  %vm387 = vcmask 900096
  %v388 = vsel %vm387, %v378, %v380
  %v389 = vsel %vm387, %v380, %v382
  %v390 = vsel %vm387, %v382, %v384
  %v391 = vsel %vm387, %v384, %v386
  %396 = vst [vmem:[#allocation2 + $0x40] sm:$0xf0] %v388
  %397 = vst [vmem:[#allocation2 + $0x48] sm:$0xf0] %v389
  %398 = vst [vmem:[#allocation2 + $0x50] sm:$0xf0] %v390
  %399 = vst [vmem:[#allocation2 + $0x58] sm:$0xf0] %v391
  %v400 = vld [vmem:[%s0] sm:$0xff]
  %v401 = vld [vmem:[%s0 + $0x8] sm:$0xff]
  %v402 = vld [vmem:[%s0 + $0x10] sm:$0xf]
  %v403 = vld [vmem:[%s1 + $0x60] sm:$0xf]
  %v404 = vld [vmem:[%s1 + $0x68] sm:$0xf]
  %v405 = vld [vmem:[%s1 + $0x70] sm:$0xf]
  %v406 = vld [vmem:[%s1 + $0x78] sm:$0xf]
  %v411 = vrot.slane %v404, 4
  %v412 = vrot.slane %v406, 4
  %v413 = vsel %vm26, %v403, %v411
  %v414 = vsel %vm26, %v405, %v412
  %415 = vrot.lane.b32.xlu0 %v413, 32
  %v416 = vpop.permute.xlu0 %415
  %417 = vrot.lane.b32.xlu0 %v414, 32
  %v418 = vpop.permute.xlu0 %417
  %v419 = vrot.slane %v416, 4
  %v420 = vrot.slane %v418, 4
  %vm421 = vcmask 261120
  %v422 = vsel %vm421, %v419, %v416
  %v423 = vsel %vm26, %v419, %v420
  %v424 = vsel %vm421, %v423, %v418
  %v428 = vmul.f32 %v400, %v422
  %v429 = vmul.f32 %v401, %v424
  %v430 = vmul.f32 %v402, %v420
  %434 = vst [vmem:[#allocation1] ss:$2 sm:$0xff] %v428
  %s435 = scalar_lea.vmem [#allocation1], 16
  %436 = vst [vmem:[%s435] ss:$2 sm:$0xff] %v429
  %s437 = scalar_lea.vmem [#allocation1], 32
  %438 = vst [vmem:[%s437] ss:$2 sm:$0xff] %v430
  %v439 = vld.sshfl [vmem:[#allocation1] sm:$0xff pattern:$0x75316420]
  %v440 = vld.sshfl [vmem:[#allocation1 + $0x8] sm:$0xff pattern:$0x75316420]
  %v441 = vld.sshfl [vmem:[#allocation1 + $0x10] sm:$0xff pattern:$0x75316420]
  %v442 = vld.sshfl [vmem:[#allocation1 + $0x18] sm:$0xff pattern:$0x75316420]
  %v443 = vld.sshfl [vmem:[#allocation1 + $0x20] sm:$0xff pattern:$0x75316420]
  %444 = vrot.lane.b32.xlu0 %v439, 96
  %v445 = vpop.permute.xlu0 %444
  %446 = vrot.lane.b32.xlu0 %v440, 96
  %v447 = vpop.permute.xlu0 %446
  %448 = vrot.lane.b32.xlu0 %v441, 96
  %v449 = vpop.permute.xlu0 %448
  %450 = vrot.lane.b32.xlu0 %v442, 96
  %v451 = vpop.permute.xlu0 %450
  %452 = vrot.lane.b32.xlu0 %v443, 96
  %v453 = vpop.permute.xlu0 %452
  %vm454 = vcmask 785408
  %v455 = vsel %vm454, %v445, %v447
  %v456 = vsel %vm454, %v447, %v449
  %v457 = vsel %vm454, %v449, %v451
  %v458 = vsel %vm454, %v451, %v453
  %463 = vst [vmem:[#allocation2 + $0x60] sm:$0xf] %v455
  %464 = vst [vmem:[#allocation2 + $0x68] sm:$0xf] %v456
  %465 = vst [vmem:[#allocation2 + $0x70] sm:$0xf] %v457
  %466 = vst [vmem:[#allocation2 + $0x78] sm:$0xf] %v458
  %v467 = vld [vmem:[%s0] sm:$0xff]
  %v468 = vld [vmem:[%s0 + $0x8] sm:$0xff]
  %v469 = vld [vmem:[%s0 + $0x10] sm:$0xf]
  %v470 = vld [vmem:[%s1 + $0x60] sm:$0xf0]
  %v471 = vld [vmem:[%s1 + $0x68] sm:$0xf0]
  %v472 = vld [vmem:[%s1 + $0x70] sm:$0xf0]
  %v473 = vld [vmem:[%s1 + $0x78] sm:$0xf0]
  %478 = vst.sshfl [vmem:[#allocation1] sm:$0xff pattern:$0x75316420] %v470
  %479 = vst.sshfl [vmem:[#allocation1 + $0x8] sm:$0xff pattern:$0x75316420] %v471
  %480 = vst.sshfl [vmem:[#allocation1 + $0x10] sm:$0xff pattern:$0x75316420] %v472
  %481 = vst.sshfl [vmem:[#allocation1 + $0x18] sm:$0xff pattern:$0x75316420] %v473
  %s482 = scalar_lea.vmem [#allocation1], 1
  %v483 = vld [vmem:[%s482] ss:$2 sm:$0xff]
  %s484 = scalar_lea.vmem [#allocation1], 17
  %v485 = vld [vmem:[%s484] ss:$2 sm:$0xff]
  %486 = vrot.lane.b32.xlu0 %v483, 33
  %v487 = vpop.permute.xlu0 %486
  %488 = vrot.lane.b32.xlu0 %v485, 33
  %v489 = vpop.permute.xlu0 %488
  %v490 = vrot.slane %v487, 4
  %v491 = vrot.slane %v489, 4
  %vm492 = vcmask 269312
  %v493 = vsel %vm492, %v490, %v487
  %v494 = vsel %vm26, %v490, %v491
  %v495 = vsel %vm492, %v494, %v489
  %v499 = vmul.f32 %v467, %v493
  %v500 = vmul.f32 %v468, %v495
  %v501 = vmul.f32 %v469, %v491
  %s505 = scalar_lea.vmem [#allocation1], 1
  %506 = vst [vmem:[%s505] ss:$2 sm:$0xff] %v499
  %s507 = scalar_lea.vmem [#allocation1], 17
  %508 = vst [vmem:[%s507] ss:$2 sm:$0xff] %v500
  %s509 = scalar_lea.vmem [#allocation1], 33
  %510 = vst [vmem:[%s509] ss:$2 sm:$0xff] %v501
  %v511 = vld.sshfl [vmem:[#allocation1] sm:$0xff pattern:$0x75316420]
  %v512 = vld.sshfl [vmem:[#allocation1 + $0x8] sm:$0xff pattern:$0x75316420]
  %v513 = vld.sshfl [vmem:[#allocation1 + $0x10] sm:$0xff pattern:$0x75316420]
  %v514 = vld.sshfl [vmem:[#allocation1 + $0x18] sm:$0xff pattern:$0x75316420]
  %v515 = vld.sshfl [vmem:[#allocation1 + $0x20] sm:$0xff pattern:$0x75316420]
  %516 = vrot.lane.b32.xlu0 %v511, 95
  %v517 = vpop.permute.xlu0 %516
  %518 = vrot.lane.b32.xlu0 %v512, 95
  %v519 = vpop.permute.xlu0 %518
  %520 = vrot.lane.b32.xlu0 %v513, 95
  %v521 = vpop.permute.xlu0 %520
  %522 = vrot.lane.b32.xlu0 %v514, 95
  %v523 = vpop.permute.xlu0 %522
  %524 = vrot.lane.b32.xlu0 %v515, 95
  %v525 = vpop.permute.xlu0 %524
  %vm526 = vcmask 777216
  %v527 = vsel %vm526, %v517, %v519
  %v528 = vsel %vm526, %v519, %v521
  %v529 = vsel %vm526, %v521, %v523
  %v530 = vsel %vm526, %v523, %v525
  %535 = vst [vmem:[#allocation2 + $0x60] sm:$0xf0] %v527
  %536 = vst [vmem:[#allocation2 + $0x68] sm:$0xf0] %v528
  %537 = vst [vmem:[#allocation2 + $0x70] sm:$0xf0] %v529
  %538 = vst [vmem:[#allocation2 + $0x78] sm:$0xf0] %v530
  %v539 = vld [vmem:[%s0] sm:$0xff]
  %v540 = vld [vmem:[%s0 + $0x8] sm:$0xff]
  %v541 = vld [vmem:[%s0 + $0x10] sm:$0xf]
  %v542 = vld [vmem:[%s1 + $0x80] sm:$0xf]
  %v543 = vld [vmem:[%s1 + $0x88] sm:$0xf]
  %v544 = vld [vmem:[%s1 + $0x90] sm:$0xf]
  %v545 = vld [vmem:[%s1 + $0x98] sm:$0xf]
  %v550 = vrot.slane %v543, 4
  %v551 = vrot.slane %v545, 4
  %v552 = vsel %vm26, %v542, %v550
  %v553 = vsel %vm26, %v544, %v551
  %554 = vrot.lane.b32.xlu0 %v552, 34
  %v555 = vpop.permute.xlu0 %554
  %556 = vrot.lane.b32.xlu0 %v553, 34
  %v557 = vpop.permute.xlu0 %556
  %v558 = vrot.slane %v555, 4
  %v559 = vrot.slane %v557, 4
  %vm560 = vcmask 277504
  %v561 = vsel %vm560, %v558, %v555
  %v562 = vsel %vm26, %v558, %v559
  %v563 = vsel %vm560, %v562, %v557
  %v567 = vmul.f32 %v539, %v561
  %v568 = vmul.f32 %v540, %v563
  %v569 = vmul.f32 %v541, %v559
  %573 = vst [vmem:[#allocation1] ss:$2 sm:$0xff] %v567
  %s574 = scalar_lea.vmem [#allocation1], 16
  %575 = vst [vmem:[%s574] ss:$2 sm:$0xff] %v568
  %s576 = scalar_lea.vmem [#allocation1], 32
  %577 = vst [vmem:[%s576] ss:$2 sm:$0xff] %v569
  %v578 = vld.sshfl [vmem:[#allocation1] sm:$0xff pattern:$0x75316420]
  %v579 = vld.sshfl [vmem:[#allocation1 + $0x8] sm:$0xff pattern:$0x75316420]
  %v580 = vld.sshfl [vmem:[#allocation1 + $0x10] sm:$0xff pattern:$0x75316420]
  %v581 = vld.sshfl [vmem:[#allocation1 + $0x18] sm:$0xff pattern:$0x75316420]
  %v582 = vld.sshfl [vmem:[#allocation1 + $0x20] sm:$0xff pattern:$0x75316420]
  %583 = vrot.lane.b32.xlu0 %v578, 94
  %v584 = vpop.permute.xlu0 %583
  %585 = vrot.lane.b32.xlu0 %v579, 94
  %v586 = vpop.permute.xlu0 %585
  %587 = vrot.lane.b32.xlu0 %v580, 94
  %v588 = vpop.permute.xlu0 %587
  %589 = vrot.lane.b32.xlu0 %v581, 94
  %v590 = vpop.permute.xlu0 %589
  %591 = vrot.lane.b32.xlu0 %v582, 94
  %v592 = vpop.permute.xlu0 %591
  %vm593 = vcmask 769024
  %v594 = vsel %vm593, %v584, %v586
  %v595 = vsel %vm593, %v586, %v588
  %v596 = vsel %vm593, %v588, %v590
  %v597 = vsel %vm593, %v590, %v592
  %602 = vst [vmem:[#allocation2 + $0x80] sm:$0xf] %v594
  %603 = vst [vmem:[#allocation2 + $0x88] sm:$0xf] %v595
  %604 = vst [vmem:[#allocation2 + $0x90] sm:$0xf] %v596
  %605 = vst [vmem:[#allocation2 + $0x98] sm:$0xf] %v597
  %606 = vst [vmem:[#allocation2 + $0x80] sm:$0xf0] 0.0
  %607 = vst [vmem:[#allocation2 + $0x88] sm:$0xf0] 0.0
  %608 = vst [vmem:[#allocation2 + $0x90] sm:$0xf0] 0.0
  %609 = vst [vmem:[#allocation2 + $0x98] sm:$0xf0] 0.0
  %v610 = vld [vmem:[%s2] sm:$0xff]
  %v611 = vld [vmem:[%s2 + $0x8] sm:$0x3]
  %v612 = vld [vmem:[#allocation2] sm:$0xff]
  %v613 = vld [vmem:[#allocation2 + $0x8] sm:$0xff]
  %v614 = vld [vmem:[#allocation2 + $0x10] sm:$0xff]
  %v615 = vld [vmem:[#allocation2 + $0x18] sm:$0xff]
  %v616 = vld [vmem:[#allocation2 + $0x20] sm:$0xff]
  %v617 = vld [vmem:[#allocation2 + $0x28] sm:$0xff]
  %v618 = vld [vmem:[#allocation2 + $0x30] sm:$0xff]
  %v619 = vld [vmem:[#allocation2 + $0x38] sm:$0xff]
  %v620 = vld [vmem:[#allocation2 + $0x40] sm:$0xff]
  %v621 = vld [vmem:[#allocation2 + $0x48] sm:$0xff]
  %v622 = vld [vmem:[#allocation2 + $0x50] sm:$0xff]
  %v623 = vld [vmem:[#allocation2 + $0x58] sm:$0xff]
  %v624 = vld [vmem:[#allocation2 + $0x60] sm:$0xff]
  %v625 = vld [vmem:[#allocation2 + $0x68] sm:$0xff]
  %v626 = vld [vmem:[#allocation2 + $0x70] sm:$0xff]
  %v627 = vld [vmem:[#allocation2 + $0x78] sm:$0xff]
  %v628 = vld [vmem:[#allocation2 + $0x80] sm:$0xff]
  %v629 = vld [vmem:[#allocation2 + $0x88] sm:$0xff]
  %v630 = vld [vmem:[#allocation2 + $0x90] sm:$0xff]
  %v631 = vld [vmem:[#allocation2 + $0x98] sm:$0xff]
  %633 = vset.pattern.permute.xlu0 40
  %634 = vperm.xlu0 %633, %v610
  %v635 = vpop.permute.xlu0 %634
  %vm637 = vcmask 326656
  %v638 = vsel %vm637, %v610, 0
  %640 = vmatpush.msra.mxu0 0.0
  %641 = vmatpush.msra.mxu0 0.0
  %642 = vmatpush.msra.mxu0 0.0
  %643 = vmatpush.msra.mxu0 0.0
  %644 = vmatpush.msra.mxu0 0.0
  %645 = vmatpush.msra.mxu0 0.0
  %646 = vmatpush.msra.mxu0 0.0
  %647 = vmatpush.msra.mxu0 0.0
  %648 = vmatpush.msra.mxu0 0.0
  %649 = vmatpush.msra.mxu0 0.0
  %650 = vmatpush.msra.mxu0 0.0
  %651 = vmatpush.msra.mxu0 %v628
  %652 = vmatpush.msra.mxu0 %v624
  %653 = vmatpush.msra.mxu0 %v620
  %654 = vmatpush.msra.mxu0 %v616
  %655 = vmatpush.msra.mxu0 %v612
  %656 = vmatmul.f32.gmra.mxu0 %v638
  %v657 = vpop.f32.mrf.mxu0
  %v658 = vadd.f32 %v635, %v657
  %659 = vdwg.mxu0
  %660 = vmatpush.msra.mxu0 0.0
  %661 = vmatpush.msra.mxu0 0.0
  %662 = vmatpush.msra.mxu0 0.0
  %663 = vmatpush.msra.mxu0 0.0
  %664 = vmatpush.msra.mxu0 0.0
  %665 = vmatpush.msra.mxu0 0.0
  %666 = vmatpush.msra.mxu0 0.0
  %667 = vmatpush.msra.mxu0 0.0
  %668 = vmatpush.msra.mxu0 0.0
  %669 = vmatpush.msra.mxu0 0.0
  %670 = vmatpush.msra.mxu0 0.0
  %671 = vmatpush.msra.mxu0 %v629
  %672 = vmatpush.msra.mxu0 %v625
  %673 = vmatpush.msra.mxu0 %v621
  %674 = vmatpush.msra.mxu0 %v617
  %675 = vmatpush.msra.mxu0 %v613
  %676 = vmatmul.f32.gmra.mxu0 %v638
  %v677 = vpop.f32.mrf.mxu0
  %v678 = vadd.f32 %v635, %v677
  %679 = vdwg.mxu0
  %680 = vmatpush.msra.mxu0 0.0
  %681 = vmatpush.msra.mxu0 0.0
  %682 = vmatpush.msra.mxu0 0.0
  %683 = vmatpush.msra.mxu0 0.0
  %684 = vmatpush.msra.mxu0 0.0
  %685 = vmatpush.msra.mxu0 0.0
  %686 = vmatpush.msra.mxu0 0.0
  %687 = vmatpush.msra.mxu0 0.0
  %688 = vmatpush.msra.mxu0 0.0
  %689 = vmatpush.msra.mxu0 0.0
  %690 = vmatpush.msra.mxu0 0.0
  %691 = vmatpush.msra.mxu0 %v630
  %692 = vmatpush.msra.mxu0 %v626
  %693 = vmatpush.msra.mxu0 %v622
  %694 = vmatpush.msra.mxu0 %v618
  %695 = vmatpush.msra.mxu0 %v614
  %696 = vmatmul.f32.gmra.mxu0 %v638
  %v697 = vpop.f32.mrf.mxu0
  %v698 = vadd.f32 %v635, %v697
  %699 = vdwg.mxu0
  %700 = vmatpush.msra.mxu0 0.0
  %701 = vmatpush.msra.mxu0 0.0
  %702 = vmatpush.msra.mxu0 0.0
  %703 = vmatpush.msra.mxu0 0.0
  %704 = vmatpush.msra.mxu0 0.0
  %705 = vmatpush.msra.mxu0 0.0
  %706 = vmatpush.msra.mxu0 0.0
  %707 = vmatpush.msra.mxu0 0.0
  %708 = vmatpush.msra.mxu0 0.0
  %709 = vmatpush.msra.mxu0 0.0
  %710 = vmatpush.msra.mxu0 0.0
  %711 = vmatpush.msra.mxu0 %v631
  %712 = vmatpush.msra.mxu0 %v627
  %713 = vmatpush.msra.mxu0 %v623
  %714 = vmatpush.msra.mxu0 %v619
  %715 = vmatpush.msra.mxu0 %v615
  %716 = vmatmul.f32.gmra.mxu0 %v638
  %v717 = vpop.f32.mrf.mxu0
  %v718 = vadd.f32 %v635, %v717
  %719 = vdwg.mxu0
  %v720 = vmax.f32 %v658, 0.0
  %v721 = vmax.f32 %v678, 0.0
  %v722 = vmax.f32 %v698, 0.0
  %v723 = vmax.f32 %v718, 0.0
  %v724 = vadd.f32 %v720, %v721
  %725 = vadd.xlane.f32.xlu0 %v724
  %v726 = vpop.xlane.xlu0 %725
  %727 = vst.msk [vmem:[#allocation3] sm:$0xff] %vm75, %v726
  %v728 = vadd.f32 %v722, %v723
  %729 = vadd.xlane.f32.xlu0 %v728
  %v730 = vpop.xlane.xlu0 %729
  %vm731 = vcmask 15368
  %732 = vst.msk [vmem:[#allocation3] sm:$0xff] %vm731, %v730
  %v733 = vld [vmem:[#allocation3] sm:$0xff]
  %734 = vset.pattern.permute.xlu0 49
  %735 = vperm.xlu0 %734, %v610
  %v736 = vpop.permute.xlu0 %735
  %739 = vset.pattern.permute.xlu0 49
  %740 = vperm.xlu0 %739, %v611
  %v741 = vpop.permute.xlu0 %740
  %743 = vrot.lane.b32.xlu0 %v610, 87
  %v744 = vpop.permute.xlu0 %743
  %745 = vrot.lane.b32.xlu0 %v611, 87
  %v746 = vpop.permute.xlu0 %745
  %vm747 = vcmask 64512
  %v748 = vsel %vm747, %v744, 0
  %v750 = vsel %vm747, %v746, 0
  %752 = vmatpush.msra.mxu0 0.0
  %753 = vmatpush.msra.mxu0 0.0
  %754 = vmatpush.msra.mxu0 0.0
  %755 = vmatpush.msra.mxu0 0.0
  %756 = vmatpush.msra.mxu0 0.0
  %757 = vmatpush.msra.mxu0 0.0
  %758 = vmatpush.msra.mxu0 0.0
  %759 = vmatpush.msra.mxu0 0.0
  %760 = vmatpush.msra.mxu0 0.0
  %761 = vmatpush.msra.mxu0 0.0
  %762 = vmatpush.msra.mxu0 0.0
  %763 = vmatpush.msra.mxu0 0.0
  %764 = vmatpush.msra.mxu0 0.0
  %765 = vmatpush.msra.mxu0 0.0
  %766 = vmatpush.msra.mxu0 0.0
  %767 = vmatpush.msra.mxu0 %v733
  %768 = vmatmul.f32.gmra.mxu0 %v748
  %v769 = vpop.f32.mrf.mxu0
  %v770 = vadd.f32 %v736, %v769
  %771 = vmatmul.f32.gmra.mxu0 %v750
  %v772 = vpop.f32.mrf.mxu0
  %v773 = vadd.f32 %v741, %v772
  %774 = vdwg.mxu0
  %775 = vst.msk [vmem:[%s3] sm:$0xff] %vm143, %v770
  %vm776 = vcmask 9216
  %777 = vst.msk [vmem:[%s3 + $0x8] sm:$0x3] %vm776, %v773
  // Predicated region
  $region14: #{combined_model.1} parent=0 // pred_check
    _
  $region15: #{combined_model.1} parent=0 // pred_check_branch
    %779 = sbr.rel (0) target = $region17
  $region16: #{combined_model.1} parent=0 // pred_region
    _
  $region17: #{combined_model.1} parent=0 // pred_fallthru
    _
  // Predicated region
  $region18: #{combined_model.1} parent=0 // pred_check
    _
  $region19: #{combined_model.1} parent=0 // pred_check_branch
    %781 = sbr.rel (0) target = $region21
  $region20: #{combined_model.1} parent=0 // pred_region
    _
  $region21: #{combined_model.1} parent=0 // pred_fallthru
    _

</llo_original>
